<compile_context>
chip_gen: v7x
topology: tpu7x:2x2x1
jax: 0.10.0
libtpu: 0.0.40
codegen_flags: <defaults>
</compile_context>

<pallas_src>
import math

import jax
import jax.numpy as jnp
from jax.experimental import pallas as pl
from jax.experimental.pallas import tpu as pltpu


def _round_up(x: int, m: int) -> int:
    return ((x + m - 1) // m) * m


def _cdiv(a: int, b: int) -> int:
    return (a + b - 1) // b


def _linear_decoder_kernel(x_ref, w_ref, b_ref, o_ref):
    # x_ref : (tm, L)   activation tile
    # w_ref : (tn, L)   weight tile, torch (feature, latent) layout
    # b_ref : (1, tn)   bias tile
    # o_ref : (tm, tn)  output tile
    #
    # Edge-tile invariant: OOB rows/cols of x and W are garbage VMEM, but the
    # contraction is only over L (never tiled), so no reduction crosses masked
    # elements and the garbage outputs are masked on writeback.  A future
    # K-tiled (accumulating) variant must NOT rely on this.
    acc = jax.lax.dot_general(
        x_ref[...],
        w_ref[...],
        dimension_numbers=(((1,), (1,)), ((), ())),  # contract last dims: x @ W.T
        preferred_element_type=jnp.float32,
    )
    o_ref[...] = (acc + b_ref[...]).astype(o_ref.dtype)


# Below this many output elements the pallas_call launch / per-step overhead
# dominates; XLA's fused matmul is equal or faster there.
_PALLAS_MIN_OUT_ELEMS = 1 << 20          # ~1M output elements

_FALLBACK_VMEM_BYTES = 64 * 1024 * 1024  # conservative: v7x physical VMEM


def _vmem_capacity_bytes() -> int:
    try:
        return int(pltpu.get_tpu_info().vmem_capacity_bytes)
    except Exception:
        return _FALLBACK_VMEM_BYTES


def linear_decoder_forward(x, weight, bias, *, max_tm=1024, max_tn=None,
                           force_pallas=False):
    """out = x @ weight.T + bias   (matches torch.nn.Linear forward)."""
    B, L = x.shape
    F, L_w = weight.shape
    assert L == L_w, "weight latent dim mismatch"
    assert bias.shape == (F,)

    if (not force_pallas) and (B * F < _PALLAS_MIN_OUT_ELEMS):
        # Small/medium problem: a single fused XLA matmul wins.
        out = jnp.dot(x, weight.T, preferred_element_type=jnp.float32) + bias
        return out.astype(x.dtype)

    # ------- per-generation tile budget --------------------------------------
    vmem_phys = _vmem_capacity_bytes()      # 128 MiB v5e/v6e, 64 MiB v7x
    budget = int(0.45 * vmem_phys)          # double-buffered tile footprint budget
    isz = 4                                 # f32 end-to-end

    F_pad = _round_up(F, 128)
    f_cap = F_pad if max_tn is None else min(F_pad, _round_up(max_tn, 128))

    # Weight-resident path: whole (F_pad, L) weight + bias live in VMEM and are
    # DMA'd exactly once (constant index_map); 1-D grid over batch tiles only.
    w_block_bytes = 2 * (F_pad * L + F_pad) * isz
    weight_resident = (f_cap == F_pad) and (w_block_bytes <= budget // 3)

    if weight_resident:
        tn = F_pad
        remaining = budget - w_block_bytes
        per_row = 2 * (L + tn) * isz               # x row + out row, double-buffered
        tm_fit = max(8, (remaining // per_row) // 8 * 8)
        tm = min(max_tm, tm_fit, _round_up(B, 8))
        if B > 8:
            # Keep >= 2 batch steps so both v7x TensorCores get work
            # (one extra ~0.35us grid step is noise on v5e/v6e).
            tm = min(tm, _round_up(_cdiv(B, 2), 8))
        tm = max(tm, 8)

        gB = _cdiv(B, tm)
        grid = (gB,)
        in_specs = [
            pl.BlockSpec((tm, L), lambda i: (i, 0)),   # x tile (streamed)
            pl.BlockSpec((tn, L), lambda i: (0, 0)),   # whole W, DMA'd once, resident
            pl.BlockSpec((1, tn), lambda i: (0, 0)),   # whole bias, resident
        ]
        out_specs = pl.BlockSpec((tm, tn), lambda i: (i, 0))
        dims = ("parallel",)
        bytes_accessed = isz * (B * L + F * L + F + B * F)
    else:
        # Full weight too big for VMEM: 2-D tiled grid.  The inner grid axis
        # streams whichever operand generates less total HBM traffic.
        tn = f_cap
        while tn > 128 and 2 * tn * (L + 1) * isz > budget // 2:
            tn = max(128, _round_up(tn // 2, 128))
        remaining = max(0, budget - 2 * tn * (L + 1) * isz)
        per_row = 2 * (L + tn) * isz
        tm_fit = max(8, (remaining // per_row) // 8 * 8)
        tm = max(8, min(max_tm, tm_fit, _round_up(B, 8)))

        gB, gF = _cdiv(B, tm), _cdiv(F, tn)
        stream_w = gB * F * L <= gF * B * L
        if stream_w:
            grid = (gB, gF)              # feature innermost: x resident, W streamed
            x_map = lambda i, j: (i, 0)
            w_map = lambda i, j: (j, 0)
            b_map = lambda i, j: (0, j)
            o_map = lambda i, j: (i, j)
            bytes_accessed = isz * (B * L + gB * (F * L + F) + B * F)
        else:
            grid = (gF, gB)              # batch innermost: W resident, x streamed
            x_map = lambda j, i: (i, 0)
            w_map = lambda j, i: (j, 0)
            b_map = lambda j, i: (0, j)
            o_map = lambda j, i: (i, j)
            bytes_accessed = isz * (gF * B * L + F * L + F + B * F)
        in_specs = [
            pl.BlockSpec((tm, L), x_map),
            pl.BlockSpec((tn, L), w_map),
            pl.BlockSpec((1, tn), b_map),
        ]
        out_specs = pl.BlockSpec((tm, tn), o_map)
        dims = ("parallel", "parallel")

    bias2d = bias.reshape(1, F)   # keep bias 2-D for TPU layout

    cost = pl.CostEstimate(
        flops=2 * B * L * F,
        transcendentals=0,
        bytes_accessed=int(bytes_accessed),
    )

    out = pl.pallas_call(
        _linear_decoder_kernel,
        out_shape=jax.ShapeDtypeStruct((B, F), x.dtype),
        grid_spec=pltpu.PrefetchScalarGridSpec(
            num_scalar_prefetch=0,
            grid=grid,
            in_specs=in_specs,
            out_specs=out_specs,
        ),
        compiler_params=pltpu.CompilerParams(
            dimension_semantics=dims,
            vmem_limit_bytes=int(min(0.85 * vmem_phys, 128 * 1024 * 1024)),
        ),
        cost_estimate=cost,
    )(x, weight, bias2d)
    return out


def _torch_linear_init(key, latent_dimensions, feature_size):
    """Deterministic params mimicking torch.nn.Linear U(-1/sqrt(fan_in), ...)."""
    kw, kb = jax.random.split(key)
    bound = 1.0 / math.sqrt(latent_dimensions)
    weight = jax.random.uniform(
        kw, (feature_size, latent_dimensions), dtype=jnp.float32,
        minval=-bound, maxval=bound)
    bias = jax.random.uniform(
        kb, (feature_size,), dtype=jnp.float32, minval=-bound, maxval=bound)
    return weight, bias


if __name__ == "__main__":
    key = jax.random.PRNGKey(0)
    k1, k2, k3, kp1, kp2, kp3 = jax.random.split(key, 6)

    # --- Case 1: small module-like shapes (batch=4, latent=8, feature=32).
    # Dispatches to the XLA fallback; also force the Pallas weight-resident
    # path once to exercise the kernel + OOB edge masking.
    B1, L1, F1 = 4, 8, 32
    x1 = jax.random.normal(k1, (B1, L1), dtype=jnp.float32)
    w1, b1 = _torch_linear_init(kp1, L1, F1)
    ref1 = x1 @ w1.T + b1
    out1 = jax.block_until_ready(linear_decoder_forward(x1, w1, b1))
    out1_p = jax.block_until_ready(
        linear_decoder_forward(x1, w1, b1, force_pallas=True))
    assert out1.shape == (B1, F1) and out1_p.shape == (B1, F1)
    assert jnp.allclose(out1, ref1, atol=1e-5, rtol=1e-5), "small (XLA path) mismatch"
    assert jnp.allclose(out1_p, ref1, atol=1e-5, rtol=1e-5), "small (Pallas) mismatch"

    # --- Case 2: large enough to take the Pallas path naturally
    # (weight-resident, 1-D batch grid with >= 2 parallel steps).
    B2, L2, F2 = 2048, 64, 1024
    x2 = jax.random.normal(k2, (B2, L2), dtype=jnp.float32)
    w2, b2 = _torch_linear_init(kp2, L2, F2)
    ref2 = x2 @ w2.T + b2
    out2 = jax.block_until_ready(linear_decoder_forward(x2, w2, b2))
    assert out2.shape == (B2, F2)
    assert jnp.allclose(out2, ref2, atol=1e-4, rtol=1e-5), "large (Pallas resident) mismatch"

    # --- Case 3: force the 2-D tiled fallback (tn capped so the weight is NOT
    # VMEM-resident) to cover that code path.
    B3, L3, F3 = 128, 32, 512
    x3 = jax.random.normal(k3, (B3, L3), dtype=jnp.float32)
    w3, b3 = _torch_linear_init(kp3, L3, F3)
    ref3 = x3 @ w3.T + b3
    out3 = jax.block_until_ready(
        linear_decoder_forward(x3, w3, b3, max_tn=128, force_pallas=True))
    assert out3.shape == (B3, F3)
    assert jnp.allclose(out3, ref3, atol=1e-4, rtol=1e-5), "tiled (Pallas 2-D) mismatch"

    print("KERNEL_OK")
</pallas_src>

<mosaic_0001>
module attributes {stable_mosaic.version = 11 : i64} {
  func.func @_linear_decoder_kernel(%arg0: i32, %arg1: memref<8x8xf32, #tpu.memory_space<vmem>>, %arg2: memref<128x8xf32, #tpu.memory_space<vmem>>, %arg3: memref<1x128xf32, #tpu.memory_space<vmem>>, %arg4: memref<8x128xf32, #tpu.memory_space<vmem>>) attributes {dimension_semantics = [#tpu.dimension_semantics<parallel>], iteration_bounds = array<i64: 1>, scalar_prefetch = 0 : i64, scratch_operands = 0 : i64, tpu.core_type = #tpu.core_type<tc>, window_params = [{transform_indices = @transform_0, window_bounds = array<i64: 8, 8>}, {transform_indices = @transform_1, window_bounds = array<i64: 128, 8>}, {transform_indices = @transform_2, window_bounds = array<i64: 1, 128>}, {transform_indices = @transform_3, window_bounds = array<i64: 8, 128>}]} {
    %c0 = arith.constant 0 : index
    %c0_0 = arith.constant 0 : index
    %0 = vector.load %arg1[%c0, %c0_0] : memref<8x8xf32, #tpu.memory_space<vmem>>, vector<8x8xf32>
    %c0_1 = arith.constant 0 : index
    %c0_2 = arith.constant 0 : index
    %1 = vector.load %arg2[%c0_1, %c0_2] : memref<128x8xf32, #tpu.memory_space<vmem>>, vector<128x8xf32>
    %cst = arith.constant dense<0.000000e+00> : vector<8x128xf32>
    %2 = tpu.matmul %0, %1, %cst {dimension_numbers = #tpu.dot_dimension_numbers<[1], [1], [0], [0], [0, 0, 1, 0], [], []>} : vector<8x8xf32>, vector<128x8xf32>, vector<8x128xf32> -> vector<8x128xf32>
    %c0_3 = arith.constant 0 : index
    %c0_4 = arith.constant 0 : index
    %3 = vector.load %arg3[%c0_3, %c0_4] : memref<1x128xf32, #tpu.memory_space<vmem>>, vector<1x128xf32>
    %4 = vector.broadcast %3 : vector<1x128xf32> to vector<8x128xf32>
    %5 = arith.addf %2, %4 : vector<8x128xf32>
    %c0_5 = arith.constant 0 : index
    %c0_6 = arith.constant 0 : index
    %6 = vector.load %arg4[%c0_5, %c0_6] : memref<8x128xf32, #tpu.memory_space<vmem>>, vector<8x128xf32>
    tpu.vector_store %arg4[%c0_5, %c0_6], %5 {strides = array<i32>} : memref<8x128xf32, #tpu.memory_space<vmem>>, vector<8x128xf32>,
    return
  }
  func.func @transform_0(%arg0: i32) -> (i32, i32) {
    %c0_i32 = arith.constant 0 : i32
    %c0_i32_0 = arith.constant 0 : i32
    return %arg0, %c0_i32 : i32, i32
  }
  func.func @transform_1(%arg0: i32) -> (i32, i32) {
    %c0_i32 = arith.constant 0 : i32
    %c0_i32_0 = arith.constant 0 : i32
    %c0_i32_1 = arith.constant 0 : i32
    return %c0_i32, %c0_i32_0 : i32, i32
  }
  func.func @transform_2(%arg0: i32) -> (i32, i32) {
    %c0_i32 = arith.constant 0 : i32
    %c0_i32_0 = arith.constant 0 : i32
    %c0_i32_1 = arith.constant 0 : i32
    return %c0_i32, %c0_i32_0 : i32, i32
  }
  func.func @transform_3(%arg0: i32) -> (i32, i32) {
    %c0_i32 = arith.constant 0 : i32
    %c0_i32_0 = arith.constant 0 : i32
    return %arg0, %c0_i32 : i32, i32
  }
}

</mosaic_0001>

<llo_original>
// kernel: tpu_custom_call.1
$region0: #{tpu_custom_call.1}
  #allocation0 [shape = 'u32[]', space=smem, size = 0x4, offset = 0x4, fixed_abs, tag = 'smem constant byte address 0x4 - core index']
  #allocation1 [shape = 'u32[144,128]{1,0:T(1,128)}', space=vmem, size = 0x12000, scoped, tag = 'internal scratch']
  %s0 = inlined_call_operand.vmem [shape: f32[4,8], index: 0, kind: input, shape index: {}]
  %s1 = inlined_call_operand.vmem [shape: f32[32,8], index: 1, kind: input, shape index: {}]
  %s2 = inlined_call_operand.vmem [shape: f32[1,32], index: 2, kind: input, shape index: {}]
  %s3 = inlined_call_operand.hbm [shape: f32[4,32], index: 3, kind: output, shape index: {}]
  %s4 = sld [smem:[#allocation0]]
  $region22: #{tpu_custom_call.1} parent=0
    _
  %s6 = ssub.s32 1, %s4
  %s7 = scalar_select 0, %s6, %s4
  $region1: #{tpu_custom_call.1} parent=0
    #allocation2 [shape = 'u8[4096]{0}', space=vmem, size = 0x1000, scoped, tag = 'output window, operand 0, single buffered']
    #allocation3 [shape = 's32[1]{0}', space=sflag, size = 0x4, scoped, tag = 'scoped memory for tpu_custom_call.1']
    %8 = vsyncpa [#allocation3], 0
    // Predicated region
    $region2: #{tpu_custom_call.1} parent=1 // pred_check
      _
    $region3: #{tpu_custom_call.1} parent=1 // pred_check_branch
      %10 = sbr.rel (0) target = $region5
    $region4: #{tpu_custom_call.1} parent=1 // pred_region
      _
    $region5: #{tpu_custom_call.1} parent=1 // pred_fallthru
      _
    // Predicated region
    $region6: #{tpu_custom_call.1} parent=1 // pred_check
      _
    $region7: #{tpu_custom_call.1} parent=1 // pred_check_branch
      %12 = sbr.rel (0) target = $region9
    $region8: #{tpu_custom_call.1} parent=1 // pred_region
      _
    $region9: #{tpu_custom_call.1} parent=1 // pred_fallthru
      _
    // Predicated region
    $region10: #{tpu_custom_call.1} parent=1 // pred_check
      _
    $region11: #{tpu_custom_call.1} parent=1 // pred_check_branch
      %14 = sbr.rel (0) target = $region13
    $region12: #{tpu_custom_call.1} parent=1 // pred_region
      _
    $region13: #{tpu_custom_call.1} parent=1 // pred_fallthru
      _
    %v15 = vld [vmem:[%s0] sm:$0xff]
    %v16 = vld [vmem:[%s1] sm:$0xff]
    %v17 = vld [vmem:[%s1 + $0x8] sm:$0xff]
    %v18 = vld [vmem:[%s1 + $0x10] sm:$0xff]
    %v19 = vld [vmem:[%s1 + $0x18] sm:$0xff]
    %v20 = vld [vmem:[%s1 + $0x20] sm:$0xff]
    %v21 = vld [vmem:[%s1 + $0x28] sm:$0xff]
    %v22 = vld [vmem:[%s1 + $0x30] sm:$0xff]
    %v23 = vld [vmem:[%s1 + $0x38] sm:$0xff]
    %v24 = vld [vmem:[%s1 + $0x40] sm:$0xff]
    %v25 = vld [vmem:[%s1 + $0x48] sm:$0xff]
    %v26 = vld [vmem:[%s1 + $0x50] sm:$0xff]
    %v27 = vld [vmem:[%s1 + $0x58] sm:$0xff]
    %v28 = vld [vmem:[%s1 + $0x60] sm:$0xff]
    %v29 = vld [vmem:[%s1 + $0x68] sm:$0xff]
    %v30 = vld [vmem:[%s1 + $0x70] sm:$0xff]
    %v31 = vld [vmem:[%s1 + $0x78] sm:$0xff]
    %v32 = vld [vmem:[%s2] sm:$0x1]
    %v34 = vlaneseq
    %v35 = vshrl.u32 %v34, 7
    %v36 = vsub.s32 0, %v35
    %v37 = vrot.slane %v32, %v36
    %vm39 = vcmask 64512
    %v41 = vsel %vm39, %v15, 0
    %v44 = vsel %vm39, %v16, 0
    %v47 = vsel %vm39, %v17, 0
    %v50 = vsel %vm39, %v18, 0
    %v53 = vsel %vm39, %v19, 0
    %v56 = vsel %vm39, %v20, 0
    %v59 = vsel %vm39, %v21, 0
    %v62 = vsel %vm39, %v22, 0
    %v65 = vsel %vm39, %v23, 0
    %v68 = vsel %vm39, %v24, 0
    %v71 = vsel %vm39, %v25, 0
    %v74 = vsel %vm39, %v26, 0
    %v77 = vsel %vm39, %v27, 0
    %v80 = vsel %vm39, %v28, 0
    %v83 = vsel %vm39, %v29, 0
    %v86 = vsel %vm39, %v30, 0
    %v89 = vsel %vm39, %v31, 0
    %91 = vmatprep.subr.mxu0 0.0
    %92 = vmatpush1.xpose.msra.mxu0 %v44
    %93 = vmatprep.subr.mxu0 0.0
    %94 = vmatpush1.xpose.msra.mxu0 %v47
    %95 = vmatprep.subr.mxu0 0.0
    %96 = vmatpush1.xpose.msra.mxu0 %v50
    %97 = vmatprep.subr.mxu0 0.0
    %98 = vmatpush1.xpose.msra.mxu0 %v53
    %99 = vmatprep.subr.mxu0 0.0
    %100 = vmatpush1.xpose.msra.mxu0 %v56
    %101 = vmatprep.subr.mxu0 0.0
    %102 = vmatpush1.xpose.msra.mxu0 %v59
    %103 = vmatprep.subr.mxu0 0.0
    %104 = vmatpush1.xpose.msra.mxu0 %v62
    %105 = vmatprep.subr.mxu0 0.0
    %106 = vmatpush1.xpose.msra.mxu0 %v65
    %107 = vmatprep.subr.mxu0 0.0
    %108 = vmatpush1.xpose.msra.mxu0 %v68
    %109 = vmatprep.subr.mxu0 0.0
    %110 = vmatpush1.xpose.msra.mxu0 %v71
    %111 = vmatprep.subr.mxu0 0.0
    %112 = vmatpush1.xpose.msra.mxu0 %v74
    %113 = vmatprep.subr.mxu0 0.0
    %114 = vmatpush1.xpose.msra.mxu0 %v77
    %115 = vmatprep.subr.mxu0 0.0
    %116 = vmatpush1.xpose.msra.mxu0 %v80
    %117 = vmatprep.subr.mxu0 0.0
    %118 = vmatpush1.xpose.msra.mxu0 %v83
    %119 = vmatprep.subr.mxu0 0.0
    %120 = vmatpush1.xpose.msra.mxu0 %v86
    %121 = vmatprep.subr.mxu0 0.0
    %122 = vmatpush1.xpose.msra.mxu0 %v89
    %123 = vmatprep.subr.mxu0 0.0
    %124 = vmatpush1.xpose.msra.mxu0 0.0
    %125 = vmatprep.subr.mxu0 0.0
    %126 = vmatpush1.xpose.msra.mxu0 0.0
    %127 = vmatprep.subr.mxu0 0.0
    %128 = vmatpush1.xpose.msra.mxu0 0.0
    %129 = vmatprep.subr.mxu0 0.0
    %130 = vmatpush1.xpose.msra.mxu0 0.0
    %131 = vmatprep.subr.mxu0 0.0
    %132 = vmatpush1.xpose.msra.mxu0 0.0
    %133 = vmatprep.subr.mxu0 0.0
    %134 = vmatpush1.xpose.msra.mxu0 0.0
    %135 = vmatprep.subr.mxu0 0.0
    %136 = vmatpush1.xpose.msra.mxu0 0.0
    %137 = vmatprep.subr.mxu0 0.0
    %138 = vmatpush1.xpose.msra.mxu0 0.0
    %139 = vmatprep.subr.mxu0 0.0
    %140 = vmatpush1.xpose.msra.mxu0 0.0
    %141 = vmatprep.subr.mxu0 0.0
    %142 = vmatpush1.xpose.msra.mxu0 0.0
    %143 = vmatprep.subr.mxu0 0.0
    %144 = vmatpush1.xpose.msra.mxu0 0.0
    %145 = vmatprep.subr.mxu0 0.0
    %146 = vmatpush1.xpose.msra.mxu0 0.0
    %147 = vmatprep.subr.mxu0 0.0
    %148 = vmatpush1.xpose.msra.mxu0 0.0
    %149 = vmatprep.subr.mxu0 0.0
    %150 = vmatpush1.xpose.msra.mxu0 0.0
    %151 = vmatprep.subr.mxu0 0.0
    %152 = vmatpush1.xpose.msra.mxu0 0.0
    %153 = vmatprep.subr.mxu0 0.0
    %154 = vmatpush1.xpose.msra.mxu0 0.0
    %155 = vmatprep.mubr.f32.mxu0 0.0
    %156 = vmatmul.mubr.f32.gmra.mrb[0].mxu0 %v41
    %v157 = vpop.f32.mrb[0].mxu0
    %v158 = vadd.f32 %v37, %v157
    %v159 = vpop.f32.mrb[0].mxu0
    %160 = vdwg.mxu0
    %161 = vst [vmem:[#allocation2] sm:$0xff] %v158
    // Predicated region
    $region14: #{tpu_custom_call.1} parent=1 // pred_check
      _
    $region15: #{tpu_custom_call.1} parent=1 // pred_check_branch
      %163 = sbr.rel (0) target = $region17
    $region16: #{tpu_custom_call.1} parent=1 // pred_region
      %s165 = ssub.s32 128, 64
      %166 = vsyncadd [#allocation3], %s165
      %s167 = sshll.u32 [#allocation2], 4
      %s168 = int_to_ptr.vmem [resolvable:$true] %s167
      %173 = dma.vmem_to_hbm [thread:$0]  %s168, 64, %s3, [#allocation3], 64, 64, 4
    $region17: #{tpu_custom_call.1} parent=1 // pred_fallthru
      _
    // Predicated region
    $region18: #{tpu_custom_call.1} parent=1 // pred_check
      _
    $region19: #{tpu_custom_call.1} parent=1 // pred_check_branch
      %175 = sbr.rel (0) target = $region21
    $region20: #{tpu_custom_call.1} parent=1 // pred_region
      %176 = dma.done [#allocation3], 128
    $region21: #{tpu_custom_call.1} parent=1 // pred_fallthru
      _
    %177 = vsyncpa [#allocation3], 1

</llo_original>
